<compile_context>
chip_gen: v6e
topology: v6e:2x2x1
jax: 0.10.0
libtpu: 0.0.40
codegen_flags: <defaults>
</compile_context>

<pallas_src>
import jax
import jax.numpy as jnp
import numpy as np
from jax.experimental import pallas as pl
from jax.experimental.pallas import tpu as pltpu

LANE = 128


def _round_up(a, b):
    return ((a + b - 1) // b) * b


def equalized_conv_transpose_1d(x, weights, bias, *, stride=1, padding=0,
                                output_padding=0, upscale=False,
                                compute_dtype=jnp.bfloat16,
                                out_dtype=jnp.float32):
    """Forward pass of EqualizedConvTranspose1D.

    x: (N, C_in, L); weights: (C_in, C_out, K); bias: (C_out,).
    Returns (N, C_out, L_out) in out_dtype, matching
    conv_transpose1d(x, blur(weights)*scale, bias, stride, padding, output_padding).

    NOTE: compute_dtype=bf16 (default) feeds the MXU in bf16 with f32 accumulation
    and halves the HBM traffic of the wrapper glue; pass compute_dtype=jnp.float32
    for exact f32 PyTorch-module math.
    """
    N, C_in, L = x.shape
    c_in_w, C_out, _ = weights.shape
    assert c_in_w == C_in
    scale = float(np.sqrt(2.0) / np.sqrt(C_in))
    cdt = jnp.dtype(compute_dtype)

    # ---- weight preprocessing (tiny; hoist/cache per layer & jit in real use) ----
    w32 = weights.astype(jnp.float32)
    if upscale:
        wpad = jnp.pad(w32, ((0, 0), (0, 0), (1, 1)))
        w32 = wpad[:, :, :-1] + wpad[:, :, 1:]
    w32 = w32 * scale
    Keff = w32.shape[2]
    # flip kernel axis, reorder to (Keff, C_out, C_in): wf[k,o,c] = w_eff[c,o,Keff-1-k]
    wf = jnp.transpose(w32[:, :, ::-1], (2, 1, 0)).astype(cdt)
    b_col = bias.astype(jnp.float32).reshape(C_out, 1)

    L_out = (L - 1) * stride - 2 * padding + Keff + output_padding
    if L_out <= 0:
        raise ValueError("non-positive transpose-conv output length")
    L_halo = L_out + Keff - 1
    L_halo_pad = _round_up(L_halo, LANE)

    # ---- input glue: cast FIRST, then one scatter into the halo'd buffer ----
    x_c = x.astype(cdt)
    if padding <= Keff - 1:
        # common case: single zero-buffer + strided scatter (one materialization)
        start = Keff - 1 - padding
        x_halo = jnp.zeros((N, C_in, L_halo_pad), cdt)
        x_halo = x_halo.at[:, :, start:start + (L - 1) * stride + 1:stride].set(x_c)
    else:
        # exotic padding > Keff-1: zero-stuff + pad + slice fallback
        L_up = (L - 1) * stride + 1
        x_up = jnp.zeros((N, C_in, L_up), cdt).at[:, :, ::stride].set(x_c)
        x_pad = jnp.pad(x_up, ((0, 0), (0, 0), (Keff - 1, Keff - 1 + output_padding)))
        x_halo = x_pad[:, :, padding:padding + L_halo]
        x_halo = jnp.pad(x_halo, ((0, 0), (0, 0), (0, L_halo_pad - L_halo)))

    # chunk the output length so the f32 accumulator stays ~<=1.5 MiB
    acc_budget = 3 << 19
    chunk = min(_round_up(L_out, LANE),
                max(LANE, (acc_budget // max(4 * C_out, 1)) // LANE * LANE))

    def kernel(w_ref, x_ref, b_ref, o_ref):
        # w_ref: (Keff, C_out, C_in)   x_ref: (C_in, L_halo_pad)
        # b_ref: (C_out, 1)            o_ref: (C_out, L_out)
        b = b_ref[...]
        for j0 in range(0, L_out, chunk):              # static, unrolled
            jw = min(chunk, L_out - j0)
            acc = jnp.dot(w_ref[0], x_ref[:, j0:j0 + jw],
                          preferred_element_type=jnp.float32)
            for k in range(1, Keff):                   # static, unrolled
                acc = acc + jnp.dot(w_ref[k], x_ref[:, j0 + k:j0 + k + jw],
                                    preferred_element_type=jnp.float32)
            o_ref[:, j0:j0 + jw] = (acc + b).astype(o_ref.dtype)

    # shape-aware VMEM limit: weights/bias single-buffered, activations double-buffered
    it, ot = cdt.itemsize, jnp.dtype(out_dtype).itemsize
    need = (Keff * _round_up(C_out, 8) * _round_up(C_in, LANE) * it
            + 2 * _round_up(C_in, 8) * L_halo_pad * it
            + 2 * _round_up(C_out, 8) * _round_up(L_out, LANE) * ot
            + 2 * _round_up(C_out, 8) * chunk * 4
            + (2 << 20))
    vmem_limit = int(min(max(2 * need, 32 << 20), 100 << 20))

    def run(single_buffer_consts):
        const_kw = dict(pipeline_mode=pl.Buffered(1)) if single_buffer_consts else {}
        return pl.pallas_call(
            kernel,
            out_shape=jax.ShapeDtypeStruct((N, C_out, L_out), out_dtype),
            grid=(N,),
            in_specs=[
                pl.BlockSpec((Keff, C_out, C_in), lambda n: (0, 0, 0), **const_kw),
                pl.BlockSpec((None, C_in, L_halo_pad), lambda n: (n, 0, 0)),
                pl.BlockSpec((C_out, 1), lambda n: (0, 0), **const_kw),
            ],
            out_specs=pl.BlockSpec((None, C_out, L_out), lambda n: (n, 0, 0)),
            compiler_params=pltpu.CompilerParams(
                dimension_semantics=("parallel",),
                vmem_limit_bytes=vmem_limit,
            ),
        )(wf, x_halo, b_col)

    try:
        # constant-index weights/bias don't need double buffers -> save VMEM
        return run(True)
    except Exception:
        # fallback for jax versions that reject pipeline_mode / Buffered(1)
        return run(False)


def _ref_conv_transpose1d(x, w, b, stride, padding, output_padding, upscale, in_channels):
    """Pure-numpy reference of the PyTorch module's forward (double precision)."""
    x = np.asarray(x, np.float64)
    w = np.asarray(w, np.float64)
    b = np.asarray(b, np.float64)
    if upscale:
        wpad = np.pad(w, ((0, 0), (0, 0), (1, 1)))
        w = wpad[:, :, :-1] + wpad[:, :, 1:]
    w = w * (np.sqrt(2.0) / np.sqrt(in_channels))
    N, Cin, L = x.shape
    _, Cout, K = w.shape
    Lout = (L - 1) * stride - 2 * padding + K + output_padding
    out = np.zeros((N, Cout, Lout)) + b[None, :, None]
    for n in range(N):
        for c in range(Cin):
            for o in range(Cout):
                for i in range(L):
                    for k in range(K):
                        j = i * stride + k - padding
                        if 0 <= j < Lout:
                            out[n, o, j] += x[n, c, i] * w[c, o, k]
    return out


if __name__ == "__main__":
    key = jax.random.PRNGKey(0)
    kx, kw, kb = jax.random.split(key, 3)

    # small shapes consistent with the module: batch=2, C_in=4, C_out=8, L=16, K=3
    N, C_in, C_out, L, K = 2, 4, 8, 16, 3
    x = jax.random.normal(kx, (N, C_in, L), dtype=jnp.float32)
    weights = jax.random.normal(kw, (C_in, C_out, K), dtype=jnp.float32)   # nn.init.normal_
    # module inits bias to 0; use nonzero (trained) values to exercise the bias path
    bias = 0.5 * jax.random.normal(kb, (C_out,), dtype=jnp.float32)

    configs = [
        dict(stride=2, padding=1, output_padding=1, upscale=True),
        dict(stride=1, padding=0, output_padding=0, upscale=False),
    ]
    # (compute dtype, atol, rtol): f32 exact path, bf16 MXU path with looser tolerance
    dtypes = [(jnp.float32, 1e-4, 1e-4), (jnp.bfloat16, 5e-2, 5e-2)]

    ok = True
    for cfg in configs:
        ref = _ref_conv_transpose1d(np.asarray(x), np.asarray(weights), np.asarray(bias),
                                    cfg["stride"], cfg["padding"], cfg["output_padding"],
                                    cfg["upscale"], C_in)
        for cdt, atol, rtol in dtypes:
            out = equalized_conv_transpose_1d(x, weights, bias, compute_dtype=cdt, **cfg)
            out = jax.block_until_ready(out)
            out_np = np.asarray(out)
            if out_np.shape != ref.shape or not np.allclose(out_np, ref, atol=atol, rtol=rtol):
                ok = False
                err = float(np.max(np.abs(out_np - ref))) if out_np.shape == ref.shape else float("nan")
                print("MISMATCH for config", cfg, "dtype", cdt, "max abs err:", err)

    if ok:
        print("KERNEL_OK")
</pallas_src>

<mosaic_0001>
module attributes {stable_mosaic.version = 11 : i64} {
  func.func @kernel(%arg0: i32, %arg1: memref<4x8x4xf32, #tpu.memory_space<vmem>>, %arg2: memref<1x4x128xf32, #tpu.memory_space<vmem>>, %arg3: memref<8x1xf32, #tpu.memory_space<vmem>>, %arg4: memref<1x8x33xf32, #tpu.memory_space<vmem>>) attributes {dimension_semantics = [#tpu.dimension_semantics<parallel>], iteration_bounds = array<i64: 2>, scalar_prefetch = 0 : i64, scratch_operands = 0 : i64, tpu.core_type = #tpu.core_type<tc>, window_params = [{pipeline_mode = #tpu.pipeline_mode<synchronous>, transform_indices = @transform_0, window_bounds = array<i64: 4, 8, 4>}, {transform_indices = @transform_1, window_bounds = array<i64: 1, 4, 128>}, {pipeline_mode = #tpu.pipeline_mode<synchronous>, transform_indices = @transform_2, window_bounds = array<i64: 8, 1>}, {transform_indices = @transform_3, window_bounds = array<i64: 1, 8, 33>}]} {
    %c0 = arith.constant 0 : index
    %c0_0 = arith.constant 0 : index
    %0 = vector.load %arg3[%c0, %c0_0] : memref<8x1xf32, #tpu.memory_space<vmem>>, vector<8x1xf32>
    %c0_1 = arith.constant 0 : index
    %c0_2 = arith.constant 0 : index
    %c0_3 = arith.constant 0 : index
    %1 = vector.load %arg1[%c0_1, %c0_2, %c0_3] : memref<4x8x4xf32, #tpu.memory_space<vmem>>, vector<1x8x4xf32>
    %2 = vector.shape_cast %1 : vector<1x8x4xf32> to vector<8x4xf32>
    %c0_4 = arith.constant 0 : index
    %c0_5 = arith.constant 0 : index
    %c0_6 = arith.constant 0 : index
    %3 = vector.load %arg2[%c0_4, %c0_5, %c0_6] : memref<1x4x128xf32, #tpu.memory_space<vmem>>, vector<1x4x33xf32>
    %4 = vector.shape_cast %3 : vector<1x4x33xf32> to vector<4x33xf32>
    %cst = arith.constant dense<0.000000e+00> : vector<8x33xf32>
    %5 = tpu.matmul %2, %4, %cst {dimension_numbers = #tpu.dot_dimension_numbers<[1], [0], [0], [1], [0, 0, 1, 1], [], []>} : vector<8x4xf32>, vector<4x33xf32>, vector<8x33xf32> -> vector<8x33xf32>
    %c1 = arith.constant 1 : index
    %c0_7 = arith.constant 0 : index
    %c0_8 = arith.constant 0 : index
    %6 = vector.load %arg1[%c1, %c0_7, %c0_8] : memref<4x8x4xf32, #tpu.memory_space<vmem>>, vector<1x8x4xf32>
    %7 = vector.shape_cast %6 : vector<1x8x4xf32> to vector<8x4xf32>
    %c0_9 = arith.constant 0 : index
    %c0_10 = arith.constant 0 : index
    %c1_11 = arith.constant 1 : index
    %8 = vector.load %arg2[%c0_9, %c0_10, %c1_11] : memref<1x4x128xf32, #tpu.memory_space<vmem>>, vector<1x4x33xf32>
    %9 = vector.shape_cast %8 : vector<1x4x33xf32> to vector<4x33xf32>
    %cst_12 = arith.constant dense<0.000000e+00> : vector<8x33xf32>
    %10 = tpu.matmul %7, %9, %cst_12 {dimension_numbers = #tpu.dot_dimension_numbers<[1], [0], [0], [1], [0, 0, 1, 1], [], []>} : vector<8x4xf32>, vector<4x33xf32>, vector<8x33xf32> -> vector<8x33xf32>
    %11 = arith.addf %5, %10 : vector<8x33xf32>
    %c2 = arith.constant 2 : index
    %c0_13 = arith.constant 0 : index
    %c0_14 = arith.constant 0 : index
    %12 = vector.load %arg1[%c2, %c0_13, %c0_14] : memref<4x8x4xf32, #tpu.memory_space<vmem>>, vector<1x8x4xf32>
    %13 = vector.shape_cast %12 : vector<1x8x4xf32> to vector<8x4xf32>
    %c0_15 = arith.constant 0 : index
    %c0_16 = arith.constant 0 : index
    %c2_17 = arith.constant 2 : index
    %14 = vector.load %arg2[%c0_15, %c0_16, %c2_17] : memref<1x4x128xf32, #tpu.memory_space<vmem>>, vector<1x4x33xf32>
    %15 = vector.shape_cast %14 : vector<1x4x33xf32> to vector<4x33xf32>
    %cst_18 = arith.constant dense<0.000000e+00> : vector<8x33xf32>
    %16 = tpu.matmul %13, %15, %cst_18 {dimension_numbers = #tpu.dot_dimension_numbers<[1], [0], [0], [1], [0, 0, 1, 1], [], []>} : vector<8x4xf32>, vector<4x33xf32>, vector<8x33xf32> -> vector<8x33xf32>
    %17 = arith.addf %11, %16 : vector<8x33xf32>
    %c3 = arith.constant 3 : index
    %c0_19 = arith.constant 0 : index
    %c0_20 = arith.constant 0 : index
    %18 = vector.load %arg1[%c3, %c0_19, %c0_20] : memref<4x8x4xf32, #tpu.memory_space<vmem>>, vector<1x8x4xf32>
    %19 = vector.shape_cast %18 : vector<1x8x4xf32> to vector<8x4xf32>
    %c0_21 = arith.constant 0 : index
    %c0_22 = arith.constant 0 : index
    %c3_23 = arith.constant 3 : index
    %20 = vector.load %arg2[%c0_21, %c0_22, %c3_23] : memref<1x4x128xf32, #tpu.memory_space<vmem>>, vector<1x4x33xf32>
    %21 = vector.shape_cast %20 : vector<1x4x33xf32> to vector<4x33xf32>
    %cst_24 = arith.constant dense<0.000000e+00> : vector<8x33xf32>
    %22 = tpu.matmul %19, %21, %cst_24 {dimension_numbers = #tpu.dot_dimension_numbers<[1], [0], [0], [1], [0, 0, 1, 1], [], []>} : vector<8x4xf32>, vector<4x33xf32>, vector<8x33xf32> -> vector<8x33xf32>
    %23 = arith.addf %17, %22 : vector<8x33xf32>
    %24 = vector.broadcast %0 : vector<8x1xf32> to vector<8x33xf32>
    %25 = arith.addf %23, %24 : vector<8x33xf32>
    %c0_25 = arith.constant 0 : index
    %c0_26 = arith.constant 0 : index
    %c0_27 = arith.constant 0 : index
    %26 = vector.load %arg4[%c0_25, %c0_26, %c0_27] : memref<1x8x33xf32, #tpu.memory_space<vmem>>, vector<1x8x33xf32>
    %27 = vector.shape_cast %26 : vector<1x8x33xf32> to vector<8x33xf32>
    %28 = vector.shape_cast %25 : vector<8x33xf32> to vector<1x8x33xf32>
    tpu.vector_store %arg4[%c0_25, %c0_26, %c0_27], %28 {strides = array<i32>} : memref<1x8x33xf32, #tpu.memory_space<vmem>>, vector<1x8x33xf32>,
    return
  }
  func.func @transform_0(%arg0: i32) -> (i32, i32, i32) {
    %c0_i32 = arith.constant 0 : i32
    %c0_i32_0 = arith.constant 0 : i32
    %c0_i32_1 = arith.constant 0 : i32
    %c0_i32_2 = arith.constant 0 : i32
    return %c0_i32, %c0_i32_0, %c0_i32_1 : i32, i32, i32
  }
  func.func @transform_1(%arg0: i32) -> (i32, i32, i32) {
    %c0_i32 = arith.constant 0 : i32
    %c0_i32_0 = arith.constant 0 : i32
    %c0_i32_1 = arith.constant 0 : i32
    return %arg0, %c0_i32, %c0_i32_0 : i32, i32, i32
  }
  func.func @transform_2(%arg0: i32) -> (i32, i32) {
    %c0_i32 = arith.constant 0 : i32
    %c0_i32_0 = arith.constant 0 : i32
    %c0_i32_1 = arith.constant 0 : i32
    return %c0_i32, %c0_i32_0 : i32, i32
  }
  func.func @transform_3(%arg0: i32) -> (i32, i32, i32) {
    %c0_i32 = arith.constant 0 : i32
    %c0_i32_0 = arith.constant 0 : i32
    %c0_i32_1 = arith.constant 0 : i32
    return %arg0, %c0_i32, %c0_i32_0 : i32, i32, i32
  }
}

module attributes {stable_mosaic.version = 11 : i64} {
  func.func @kernel(%arg0: i32, %arg1: memref<4x8x4xf32, #tpu.memory_space<vmem>>, %arg2: memref<1x4x128xf32, #tpu.memory_space<vmem>>, %arg3: memref<8x1xf32, #tpu.memory_space<vmem>>, %arg4: memref<1x8x33xf32, #tpu.memory_space<vmem>>) attributes {dimension_semantics = [#tpu.dimension_semantics<parallel>], iteration_bounds = array<i64: 2>, scalar_prefetch = 0 : i64, scratch_operands = 0 : i64, tpu.core_type = #tpu.core_type<tc>, window_params = [{pipeline_mode = #tpu.pipeline_mode<synchronous>, transform_indices = @transform_0, window_bounds = array<i64: 4, 8, 4>}, {transform_indices = @transform_1, window_bounds = array<i64: 1, 4, 128>}, {pipeline_mode = #tpu.pipeline_mode<synchronous>, transform_indices = @transform_2, window_bounds = array<i64: 8, 1>}, {transform_indices = @transform_3, window_bounds = array<i64: 1, 8, 33>}]} {
    %c0 = arith.constant 0 : index
    %c0_0 = arith.constant 0 : index
    %0 = vector.load %arg3[%c0, %c0_0] : memref<8x1xf32, #tpu.memory_space<vmem>>, vector<8x1xf32>
    %c0_1 = arith.constant 0 : index
    %c0_2 = arith.constant 0 : index
    %c0_3 = arith.constant 0 : index
    %1 = vector.load %arg1[%c0_1, %c0_2, %c0_3] : memref<4x8x4xf32, #tpu.memory_space<vmem>>, vector<1x8x4xf32>
    %2 = vector.shape_cast %1 : vector<1x8x4xf32> to vector<8x4xf32>
    %c0_4 = arith.constant 0 : index
    %c0_5 = arith.constant 0 : index
    %c0_6 = arith.constant 0 : index
    %3 = vector.load %arg2[%c0_4, %c0_5, %c0_6] : memref<1x4x128xf32, #tpu.memory_space<vmem>>, vector<1x4x33xf32>
    %4 = vector.shape_cast %3 : vector<1x4x33xf32> to vector<4x33xf32>
    %cst = arith.constant dense<0.000000e+00> : vector<8x33xf32>
    %5 = tpu.matmul %2, %4, %cst {dimension_numbers = #tpu.dot_dimension_numbers<[1], [0], [0], [1], [0, 0, 1, 1], [], []>} : vector<8x4xf32>, vector<4x33xf32>, vector<8x33xf32> -> vector<8x33xf32>
    %c1 = arith.constant 1 : index
    %c0_7 = arith.constant 0 : index
    %c0_8 = arith.constant 0 : index
    %6 = vector.load %arg1[%c1, %c0_7, %c0_8] : memref<4x8x4xf32, #tpu.memory_space<vmem>>, vector<1x8x4xf32>
    %7 = vector.shape_cast %6 : vector<1x8x4xf32> to vector<8x4xf32>
    %c0_9 = arith.constant 0 : index
    %c0_10 = arith.constant 0 : index
    %c1_11 = arith.constant 1 : index
    %8 = vector.load %arg2[%c0_9, %c0_10, %c1_11] : memref<1x4x128xf32, #tpu.memory_space<vmem>>, vector<1x4x33xf32>
    %9 = vector.shape_cast %8 : vector<1x4x33xf32> to vector<4x33xf32>
    %cst_12 = arith.constant dense<0.000000e+00> : vector<8x33xf32>
    %10 = tpu.matmul %7, %9, %cst_12 {dimension_numbers = #tpu.dot_dimension_numbers<[1], [0], [0], [1], [0, 0, 1, 1], [], []>} : vector<8x4xf32>, vector<4x33xf32>, vector<8x33xf32> -> vector<8x33xf32>
    %11 = arith.addf %5, %10 : vector<8x33xf32>
    %c2 = arith.constant 2 : index
    %c0_13 = arith.constant 0 : index
    %c0_14 = arith.constant 0 : index
    %12 = vector.load %arg1[%c2, %c0_13, %c0_14] : memref<4x8x4xf32, #tpu.memory_space<vmem>>, vector<1x8x4xf32>
    %13 = vector.shape_cast %12 : vector<1x8x4xf32> to vector<8x4xf32>
    %c0_15 = arith.constant 0 : index
    %c0_16 = arith.constant 0 : index
    %c2_17 = arith.constant 2 : index
    %14 = vector.load %arg2[%c0_15, %c0_16, %c2_17] : memref<1x4x128xf32, #tpu.memory_space<vmem>>, vector<1x4x33xf32>
    %15 = vector.shape_cast %14 : vector<1x4x33xf32> to vector<4x33xf32>
    %cst_18 = arith.constant dense<0.000000e+00> : vector<8x33xf32>
    %16 = tpu.matmul %13, %15, %cst_18 {dimension_numbers = #tpu.dot_dimension_numbers<[1], [0], [0], [1], [0, 0, 1, 1], [], []>} : vector<8x4xf32>, vector<4x33xf32>, vector<8x33xf32> -> vector<8x33xf32>
    %17 = arith.addf %11, %16 : vector<8x33xf32>
    %c3 = arith.constant 3 : index
    %c0_19 = arith.constant 0 : index
    %c0_20 = arith.constant 0 : index
    %18 = vector.load %arg1[%c3, %c0_19, %c0_20] : memref<4x8x4xf32, #tpu.memory_space<vmem>>, vector<1x8x4xf32>
    %19 = vector.shape_cast %18 : vector<1x8x4xf32> to vector<8x4xf32>
    %c0_21 = arith.constant 0 : index
    %c0_22 = arith.constant 0 : index
    %c3_23 = arith.constant 3 : index
    %20 = vector.load %arg2[%c0_21, %c0_22, %c3_23] : memref<1x4x128xf32, #tpu.memory_space<vmem>>, vector<1x4x33xf32>
    %21 = vector.shape_cast %20 : vector<1x4x33xf32> to vector<4x33xf32>
    %cst_24 = arith.constant dense<0.000000e+00> : vector<8x33xf32>
    %22 = tpu.matmul %19, %21, %cst_24 {dimension_numbers = #tpu.dot_dimension_numbers<[1], [0], [0], [1], [0, 0, 1, 1], [], []>} : vector<8x4xf32>, vector<4x33xf32>, vector<8x33xf32> -> vector<8x33xf32>
    %23 = arith.addf %17, %22 : vector<8x33xf32>
    %24 = vector.broadcast %0 : vector<8x1xf32> to vector<8x33xf32>
    %25 = arith.addf %23, %24 : vector<8x33xf32>
    %c0_25 = arith.constant 0 : index
    %c0_26 = arith.constant 0 : index
    %c0_27 = arith.constant 0 : index
    %26 = vector.load %arg4[%c0_25, %c0_26, %c0_27] : memref<1x8x33xf32, #tpu.memory_space<vmem>>, vector<1x8x33xf32>
    %27 = vector.shape_cast %26 : vector<1x8x33xf32> to vector<8x33xf32>
    %28 = vector.shape_cast %25 : vector<8x33xf32> to vector<1x8x33xf32>
    tpu.vector_store %arg4[%c0_25, %c0_26, %c0_27], %28 {strides = array<i32>} : memref<1x8x33xf32, #tpu.memory_space<vmem>>, vector<1x8x33xf32>,
    return
  }
  func.func @transform_0(%arg0: i32) -> (i32, i32, i32) {
    %c0_i32 = arith.constant 0 : i32
    %c0_i32_0 = arith.constant 0 : i32
    %c0_i32_1 = arith.constant 0 : i32
    %c0_i32_2 = arith.constant 0 : i32
    return %c0_i32, %c0_i32_0, %c0_i32_1 : i32, i32, i32
  }
  func.func @transform_1(%arg0: i32) -> (i32, i32, i32) {
    %c0_i32 = arith.constant 0 : i32
    %c0_i32_0 = arith.constant 0 : i32
    %c0_i32_1 = arith.constant 0 : i32
    return %arg0, %c0_i32, %c0_i32_0 : i32, i32, i32
  }
  func.func @transform_2(%arg0: i32) -> (i32, i32) {
    %c0_i32 = arith.constant 0 : i32
    %c0_i32_0 = arith.constant 0 : i32
    %c0_i32_1 = arith.constant 0 : i32
    return %c0_i32, %c0_i32_0 : i32, i32
  }
  func.func @transform_3(%arg0: i32) -> (i32, i32, i32) {
    %c0_i32 = arith.constant 0 : i32
    %c0_i32_0 = arith.constant 0 : i32
    %c0_i32_1 = arith.constant 0 : i32
    return %arg0, %c0_i32, %c0_i32_0 : i32, i32, i32
  }
}

</mosaic_0001>

<llo_original>
// kernel: tpu_custom_call.1
$region0: #{tpu_custom_call.1}
  #allocation0 [shape = 'u32[]', space=smem, size = 0x4, offset = 0x4, fixed_abs, tag = 'smem constant byte address 0x4 - core index']
  #allocation1 [shape = 'u32[144,128]{1,0:T(1,128)}', space=vmem, size = 0x12000, scoped, tag = 'internal scratch']
  %s0 = inlined_call_operand.vmem [shape: f32[4,8,4], index: 0, kind: input, shape index: {}]
  %s1 = inlined_call_operand.vmem [shape: f32[2,4,128], index: 1, kind: input, shape index: {}]
  %s2 = inlined_call_operand.vmem [shape: f32[8,1], index: 2, kind: input, shape index: {}]
  %s3 = inlined_call_operand.hbm [shape: f32[2,8,33], index: 3, kind: output, shape index: {}]
  %s4 = sld [smem:[#allocation0]]
  $region45: #{tpu_custom_call.1} parent=0
    _
  %s6 = ssub.s32 1, %s4
  %s7 = scalar_select 0, %s6, %s4
  $region1: #{tpu_custom_call.1} parent=0
    #allocation2 [shape = 'u8[8192]{0}', space=vmem, size = 0x2000, scoped, tag = 'output window, operand 0']
    #allocation3 [shape = 's32[2]{0}', space=sflag, size = 0x8, scoped, tag = 'scoped memory for tpu_custom_call.1']
    %8 = vsyncpa [#allocation3], 0
    %s9 = scalar_lea.sflag [#allocation3], 1
    %10 = vsyncpa %s9, 0
    loop: start=0, step=1, limit=4
    $region2: #{tpu_custom_call.1} parent=1 // loop_pre_header
      _
    $region3: #{tpu_custom_call.1} parent=1 // loop_header
      %s12 = sphi 0, %s16
      %p13 = scmp.ge.s32.totalorder %s12, 4
      %s20 = sphi 0, %s20
      %s22 = sphi 0, %s20
      %s23 = sphi 0, %s22
      %s37 = sphi 0, %s23
      %s43 = sphi 0, %s45
      %s46 = sphi 0, %s43
      %s47 = sphi 0, %s46
      %s63 = sphi 0, %s47
      %s67 = sphi 0, %s67
      %s69 = sphi 0, %s67
      %s70 = sphi 0, %s69
      %s84 = sphi 0, %s70
      %s90 = sphi 0, %s92
      %s93 = sphi 0, %s90
      %s94 = sphi 0, %s93
      %s110 = sphi 0, %s94
    $region4: #{tpu_custom_call.1} parent=1 // loop_header_branch
      %15 = sbr.rel (%p13) target = $region8
    $region5: #{tpu_custom_call.1} parent=1 // loop_body
      %s17 = ssub.s32 %s12, 1
      %s18 = ssub.s32 %s12, 2
      %s19 = sadd.s32 %s12, 1
      %s21 = sadd.s32 %s20, 1
      %p24 = scmp.eq.s32.totalorder %s12, 1
      %p25 = scmp.ne.s32.totalorder %s20, %s22
      %p26 = scmp.eq.s32.totalorder %s12, 0
      %p27 = por %p25, %p26
      %p28 = scmp.ne.s32.totalorder %s20, %s22
      %p29 = scmp.eq.s32.totalorder %s17, 1
      %p30 = por %p28, %p29
      %p31 = scmp.ne.s32.totalorder %s22, %s23
      %p32 = scmp.eq.s32.totalorder %s17, 0
      %p33 = por %p31, %p32
      %p34 = scmp.ne.s32.totalorder %s22, %s23
      %p35 = scmp.eq.s32.totalorder %s18, 1
      %p36 = por %p34, %p35
      %p38 = scmp.ne.s32.totalorder %s23, %s37
      %p39 = scmp.eq.s32.totalorder %s18, 0
      %p40 = por %p38, %p39
      %s41 = ssub.s32 %s12, %s19
      %p42 = scmp.eq.s32.totalorder %s41, 0
      %s44 = sadd.s32 %s43, 1
      %s45 = scalar_select %p42, %s43, %s44
      %p48 = pneg %p42
      %p49 = scmp.eq.s32.totalorder %s12, 1
      %p50 = por %p48, %p49
      %p51 = scmp.ne.s32.totalorder %s43, %s46
      %p52 = scmp.eq.s32.totalorder %s12, 0
      %p53 = por %p51, %p52
      %p54 = scmp.ne.s32.totalorder %s43, %s46
      %p55 = scmp.eq.s32.totalorder %s17, 1
      %p56 = por %p54, %p55
      %p57 = scmp.ne.s32.totalorder %s46, %s47
      %p58 = scmp.eq.s32.totalorder %s17, 0
      %p59 = por %p57, %p58
      %p60 = scmp.ne.s32.totalorder %s46, %s47
      %p61 = scmp.eq.s32.totalorder %s18, 1
      %p62 = por %p60, %p61
      %p64 = scmp.ne.s32.totalorder %s47, %s63
      %p65 = scmp.eq.s32.totalorder %s18, 0
      %p66 = por %p64, %p65
      %s68 = sadd.s32 %s67, 1
      %p71 = scmp.eq.s32.totalorder %s12, 1
      %p72 = scmp.ne.s32.totalorder %s67, %s69
      %p73 = scmp.eq.s32.totalorder %s12, 0
      %p74 = por %p72, %p73
      %p75 = scmp.ne.s32.totalorder %s67, %s69
      %p76 = scmp.eq.s32.totalorder %s17, 1
      %p77 = por %p75, %p76
      %p78 = scmp.ne.s32.totalorder %s69, %s70
      %p79 = scmp.eq.s32.totalorder %s17, 0
      %p80 = por %p78, %p79
      %p81 = scmp.ne.s32.totalorder %s69, %s70
      %p82 = scmp.eq.s32.totalorder %s18, 1
      %p83 = por %p81, %p82
      %p85 = scmp.ne.s32.totalorder %s70, %s84
      %p86 = scmp.eq.s32.totalorder %s18, 0
      %p87 = por %p85, %p86
      %s88 = ssub.s32 %s12, %s19
      %p89 = scmp.eq.s32.totalorder %s88, 0
      %s91 = sadd.s32 %s90, 1
      %s92 = scalar_select %p89, %s90, %s91
      %p95 = pneg %p89
      %p96 = scmp.eq.s32.totalorder %s12, 1
      %p97 = por %p95, %p96
      %p98 = scmp.ne.s32.totalorder %s90, %s93
      %p99 = scmp.eq.s32.totalorder %s12, 0
      %p100 = por %p98, %p99
      %p101 = scmp.ne.s32.totalorder %s90, %s93
      %p102 = scmp.eq.s32.totalorder %s17, 1
      %p103 = por %p101, %p102
      %p104 = scmp.ne.s32.totalorder %s93, %s94
      %p105 = scmp.eq.s32.totalorder %s17, 0
      %p106 = por %p104, %p105
      %p107 = scmp.ne.s32.totalorder %s93, %s94
      %p108 = scmp.eq.s32.totalorder %s18, 1
      %p109 = por %p107, %p108
      %p111 = scmp.ne.s32.totalorder %s94, %s110
      %p112 = scmp.eq.s32.totalorder %s18, 0
      %p113 = por %p111, %p112
      %p114 = scmp.le.s32.totalorder 1, %s12
      %p115 = scmp.lt.s32.totalorder %s12, 3
      %p116 = pnand %p114, %p115
      %p117 = pneg %p116
      // Predicated region
      $region9: #{tpu_custom_call.1} parent=5 // pred_check
        _
      $region10: #{tpu_custom_call.1} parent=5 // pred_check_branch
        %119 = sbr.rel (%p116) target = $region12
      $region11: #{tpu_custom_call.1} parent=5 // pred_region
        %s120 = ssub.s32 %s12, 1
        // Predicated region
        $region13: #{tpu_custom_call.1} parent=11 // pred_check
          %p121 = pneg %p33
        $region14: #{tpu_custom_call.1} parent=11 // pred_check_branch
          %123 = sbr.rel (%p121) target = $region16
        $region15: #{tpu_custom_call.1} parent=11 // pred_region
          _
        $region16: #{tpu_custom_call.1} parent=11 // pred_fallthru
          _
        // Predicated region
        $region17: #{tpu_custom_call.1} parent=11 // pred_check
          %p124 = pneg %p80
        $region18: #{tpu_custom_call.1} parent=11 // pred_check_branch
          %126 = sbr.rel (%p124) target = $region20
        $region19: #{tpu_custom_call.1} parent=11 // pred_region
          _
        $region20: #{tpu_custom_call.1} parent=11 // pred_fallthru
          _
      $region12: #{tpu_custom_call.1} parent=5 // pred_fallthru
        _
      %p127 = scmp.lt.s32.totalorder %s12, 2
      // Predicated region
      $region21: #{tpu_custom_call.1} parent=5 // pred_check
        %p128 = pneg %p127
      $region22: #{tpu_custom_call.1} parent=5 // pred_check_branch
        %130 = sbr.rel (%p128) target = $region24
      $region23: #{tpu_custom_call.1} parent=5 // pred_region
        // Predicated region
        $region25: #{tpu_custom_call.1} parent=23 // pred_check
          %p131 = pneg %p53
        $region26: #{tpu_custom_call.1} parent=23 // pred_check_branch
          %133 = sbr.rel (%p131) target = $region28
        $region27: #{tpu_custom_call.1} parent=23 // pred_region
          %p134 = scmp.lt.s32.totalorder %s12, 1
          %s135 = scalar_select %p134, %s12, 1
          %s136 = smul.addr %s135, 4
          %s137 = scalar_lea.vmem %s1, %s136
        $region28: #{tpu_custom_call.1} parent=23 // pred_fallthru
          _
      $region24: #{tpu_custom_call.1} parent=5 // pred_fallthru
        _
      %p138 = scmp.le.s32.totalorder 1, %s12
      %p139 = scmp.lt.s32.totalorder %s12, 3
      %p140 = pnand %p138, %p139
      %p141 = pneg %p140
      // Predicated region
      $region29: #{tpu_custom_call.1} parent=5 // pred_check
        _
      $region30: #{tpu_custom_call.1} parent=5 // pred_check_branch
        %143 = sbr.rel (%p140) target = $region32
      $region31: #{tpu_custom_call.1} parent=5 // pred_region
        %s144 = ssub.s32 %s12, 1
        %p145 = pneg %p33
        %p146 = pneg %p30
        %p147 = scmp.lt.s32.totalorder %s17, 1
        %s148 = scalar_select %p147, %s17, 1
        %s149 = smul.addr %s148, 4
        %s150 = scalar_lea.vmem %s1, %s149
        %p151 = pneg %p59
        %p152 = pneg %p56
        %p153 = pneg %p80
        %p154 = pneg %p77
        %p155 = pneg %p106
        %p156 = pneg %p103
        %s157 = sand.u32 %s93, 1
        %s158 = scalar_lea.sflag [#allocation3], %s157
        %s159 = sand.u32 %s93, 1
        %s160 = smul.addr %s159, 8
        %s161 = scalar_lea.vmem [#allocation2], %s160
        %p162 = scmp.lt.s32.totalorder %s17, 1
        %s163 = scalar_select %p162, %s17, 1
        %s164 = smul.addr %s163, 4
        %s165 = scalar_lea.vmem %s1, %s164
        %v166 = vld [vmem:[%s2] sm:$0xff]
        %v167 = vld [vmem:[%s0] sm:$0xff]
        %v168 = vld [vmem:[%s165] sm:$0xf]
        %s169 = scalar_lea.vmem %s0, 8
        %v170 = vld [vmem:[%s169] sm:$0xff]
        %172 = vrot.lane.b32.xlu0 %v168, 127
        %v173 = vpop.permute.xlu0 %172
        %vm174 = vcmask 31744
        %v176 = vsel %vm174, %v170, 0
        %vm178 = vcmask 1043456
        %v179 = vsel %vm178, %v173, 0
        %181 = vmatprep.subr.mxu0 0.0
        %182 = vmatpush1.msra.mxu0 0.0
        %183 = vmatprep.subr.mxu0 0.0
        %184 = vmatpush1.msra.mxu0 0.0
        %185 = vmatprep.subr.mxu0 0.0
        %186 = vmatpush1.msra.mxu0 0.0
        %187 = vmatprep.subr.mxu0 0.0
        %188 = vmatpush1.msra.mxu0 0.0
        %189 = vmatprep.subr.mxu0 0.0
        %190 = vmatpush1.msra.mxu0 0.0
        %191 = vmatprep.subr.mxu0 0.0
        %192 = vmatpush1.msra.mxu0 0.0
        %193 = vmatprep.subr.mxu0 0.0
        %194 = vmatpush1.msra.mxu0 0.0
        %195 = vmatprep.subr.mxu0 0.0
        %196 = vmatpush1.msra.mxu0 0.0
        %197 = vmatprep.subr.mxu0 0.0
        %198 = vmatpush1.msra.mxu0 0.0
        %199 = vmatprep.subr.mxu0 0.0
        %200 = vmatpush1.msra.mxu0 0.0
        %201 = vmatprep.subr.mxu0 0.0
        %202 = vmatpush1.msra.mxu0 0.0
        %203 = vmatprep.subr.mxu0 0.0
        %204 = vmatpush1.msra.mxu0 0.0
        %205 = vmatprep.subr.mxu0 0.0
        %206 = vmatpush1.msra.mxu0 0.0
        %207 = vmatprep.subr.mxu0 0.0
        %208 = vmatpush1.msra.mxu0 0.0
        %209 = vmatprep.subr.mxu0 0.0
        %210 = vmatpush1.msra.mxu0 0.0
        %211 = vmatprep.subr.mxu0 0.0
        %212 = vmatpush1.msra.mxu0 %v179
        %213 = vmatprep.subr.mxu0 0.0
        %214 = vmatpush2.msra.mxu0 0.0
        %215 = vmatprep.subr.mxu0 0.0
        %216 = vmatpush2.msra.mxu0 0.0
        %217 = vmatprep.subr.mxu0 0.0
        %218 = vmatpush2.msra.mxu0 0.0
        %219 = vmatprep.subr.mxu0 0.0
        %220 = vmatpush2.msra.mxu0 0.0
        %221 = vmatprep.subr.mxu0 0.0
        %222 = vmatpush2.msra.mxu0 0.0
        %223 = vmatprep.subr.mxu0 0.0
        %224 = vmatpush2.msra.mxu0 0.0
        %225 = vmatprep.subr.mxu0 0.0
        %226 = vmatpush2.msra.mxu0 0.0
        %227 = vmatprep.subr.mxu0 0.0
        %228 = vmatpush2.msra.mxu0 0.0
        %229 = vmatprep.subr.mxu0 0.0
        %230 = vmatpush2.msra.mxu0 0.0
        %231 = vmatprep.subr.mxu0 0.0
        %232 = vmatpush2.msra.mxu0 0.0
        %233 = vmatprep.subr.mxu0 0.0
        %234 = vmatpush2.msra.mxu0 0.0
        %235 = vmatprep.subr.mxu0 0.0
        %236 = vmatpush2.msra.mxu0 0.0
        %237 = vmatprep.subr.mxu0 0.0
        %238 = vmatpush2.msra.mxu0 0.0
        %239 = vmatprep.subr.mxu0 0.0
        %240 = vmatpush2.msra.mxu0 0.0
        %241 = vmatprep.subr.mxu0 0.0
        %242 = vmatpush2.msra.mxu0 0.0
        %243 = vmatprep.subr.mxu0 0.0
        %244 = vmatpush2.msra.mxu0 0.0
        %245 = vmatprep.mubr.f32.mxu0 0.0
        %246 = vmatmul.mubr.f32.gmra.mxu0 %v176
        %v247 = vpop.f32.mrf.mxu0
        %v248 = vadd.f32 0.0, %v247
        %v249 = vpop.f32.mrf.mxu0
        %250 = vdwg.mxu0
        %v252 = vsel %vm174, %v167, 0
        %v254 = vsel %vm178, %v168, 0
        %256 = vmatprep.subr.mxu0 0.0
        %257 = vmatpush1.msra.mxu0 0.0
        %258 = vmatprep.subr.mxu0 0.0
        %259 = vmatpush1.msra.mxu0 0.0
        %260 = vmatprep.subr.mxu0 0.0
        %261 = vmatpush1.msra.mxu0 0.0
        %262 = vmatprep.subr.mxu0 0.0
        %263 = vmatpush1.msra.mxu0 0.0
        %264 = vmatprep.subr.mxu0 0.0
        %265 = vmatpush1.msra.mxu0 0.0
        %266 = vmatprep.subr.mxu0 0.0
        %267 = vmatpush1.msra.mxu0 0.0
        %268 = vmatprep.subr.mxu0 0.0
        %269 = vmatpush1.msra.mxu0 0.0
        %270 = vmatprep.subr.mxu0 0.0
        %271 = vmatpush1.msra.mxu0 0.0
        %272 = vmatprep.subr.mxu0 0.0
        %273 = vmatpush1.msra.mxu0 0.0
        %274 = vmatprep.subr.mxu0 0.0
        %275 = vmatpush1.msra.mxu0 0.0
        %276 = vmatprep.subr.mxu0 0.0
        %277 = vmatpush1.msra.mxu0 0.0
        %278 = vmatprep.subr.mxu0 0.0
        %279 = vmatpush1.msra.mxu0 0.0
        %280 = vmatprep.subr.mxu0 0.0
        %281 = vmatpush1.msra.mxu0 0.0
        %282 = vmatprep.subr.mxu0 0.0
        %283 = vmatpush1.msra.mxu0 0.0
        %284 = vmatprep.subr.mxu0 0.0
        %285 = vmatpush1.msra.mxu0 0.0
        %286 = vmatprep.subr.mxu0 0.0
        %287 = vmatpush1.msra.mxu0 %v254
        %288 = vmatprep.subr.mxu0 0.0
        %289 = vmatpush2.msra.mxu0 0.0
        %290 = vmatprep.subr.mxu0 0.0
        %291 = vmatpush2.msra.mxu0 0.0
        %292 = vmatprep.subr.mxu0 0.0
        %293 = vmatpush2.msra.mxu0 0.0
        %294 = vmatprep.subr.mxu0 0.0
        %295 = vmatpush2.msra.mxu0 0.0
        %296 = vmatprep.subr.mxu0 0.0
        %297 = vmatpush2.msra.mxu0 0.0
        %298 = vmatprep.subr.mxu0 0.0
        %299 = vmatpush2.msra.mxu0 0.0
        %300 = vmatprep.subr.mxu0 0.0
        %301 = vmatpush2.msra.mxu0 0.0
        %302 = vmatprep.subr.mxu0 0.0
        %303 = vmatpush2.msra.mxu0 0.0
        %304 = vmatprep.subr.mxu0 0.0
        %305 = vmatpush2.msra.mxu0 0.0
        %306 = vmatprep.subr.mxu0 0.0
        %307 = vmatpush2.msra.mxu0 0.0
        %308 = vmatprep.subr.mxu0 0.0
        %309 = vmatpush2.msra.mxu0 0.0
        %310 = vmatprep.subr.mxu0 0.0
        %311 = vmatpush2.msra.mxu0 0.0
        %312 = vmatprep.subr.mxu0 0.0
        %313 = vmatpush2.msra.mxu0 0.0
        %314 = vmatprep.subr.mxu0 0.0
        %315 = vmatpush2.msra.mxu0 0.0
        %316 = vmatprep.subr.mxu0 0.0
        %317 = vmatpush2.msra.mxu0 0.0
        %318 = vmatprep.subr.mxu0 0.0
        %319 = vmatpush2.msra.mxu0 0.0
        %320 = vmatprep.mubr.f32.mxu0 0.0
        %321 = vmatmul.mubr.f32.gmra.mxu0 %v252
        %v322 = vpop.f32.mrf.mxu0
        %v323 = vadd.f32 %v248, %v322
        %v324 = vpop.f32.mrf.mxu0
        %325 = vdwg.mxu0
        %s326 = scalar_lea.vmem %s0, 16
        %v327 = vld [vmem:[%s326] sm:$0xff]
        %328 = vrot.lane.b32.xlu0 %v168, 126
        %v329 = vpop.permute.xlu0 %328
        %v331 = vsel %vm174, %v327, 0
        %v333 = vsel %vm178, %v329, 0
        %335 = vmatprep.subr.mxu0 0.0
        %336 = vmatpush1.msra.mxu0 0.0
        %337 = vmatprep.subr.mxu0 0.0
        %338 = vmatpush1.msra.mxu0 0.0
        %339 = vmatprep.subr.mxu0 0.0
        %340 = vmatpush1.msra.mxu0 0.0
        %341 = vmatprep.subr.mxu0 0.0
        %342 = vmatpush1.msra.mxu0 0.0
        %343 = vmatprep.subr.mxu0 0.0
        %344 = vmatpush1.msra.mxu0 0.0
        %345 = vmatprep.subr.mxu0 0.0
        %346 = vmatpush1.msra.mxu0 0.0
        %347 = vmatprep.subr.mxu0 0.0
        %348 = vmatpush1.msra.mxu0 0.0
        %349 = vmatprep.subr.mxu0 0.0
        %350 = vmatpush1.msra.mxu0 0.0
        %351 = vmatprep.subr.mxu0 0.0
        %352 = vmatpush1.msra.mxu0 0.0
        %353 = vmatprep.subr.mxu0 0.0
        %354 = vmatpush1.msra.mxu0 0.0
        %355 = vmatprep.subr.mxu0 0.0
        %356 = vmatpush1.msra.mxu0 0.0
        %357 = vmatprep.subr.mxu0 0.0
        %358 = vmatpush1.msra.mxu0 0.0
        %359 = vmatprep.subr.mxu0 0.0
        %360 = vmatpush1.msra.mxu0 0.0
        %361 = vmatprep.subr.mxu0 0.0
        %362 = vmatpush1.msra.mxu0 0.0
        %363 = vmatprep.subr.mxu0 0.0
        %364 = vmatpush1.msra.mxu0 0.0
        %365 = vmatprep.subr.mxu0 0.0
        %366 = vmatpush1.msra.mxu0 %v333
        %367 = vmatprep.subr.mxu0 0.0
        %368 = vmatpush2.msra.mxu0 0.0
        %369 = vmatprep.subr.mxu0 0.0
        %370 = vmatpush2.msra.mxu0 0.0
        %371 = vmatprep.subr.mxu0 0.0
        %372 = vmatpush2.msra.mxu0 0.0
        %373 = vmatprep.subr.mxu0 0.0
        %374 = vmatpush2.msra.mxu0 0.0
        %375 = vmatprep.subr.mxu0 0.0
        %376 = vmatpush2.msra.mxu0 0.0
        %377 = vmatprep.subr.mxu0 0.0
        %378 = vmatpush2.msra.mxu0 0.0
        %379 = vmatprep.subr.mxu0 0.0
        %380 = vmatpush2.msra.mxu0 0.0
        %381 = vmatprep.subr.mxu0 0.0
        %382 = vmatpush2.msra.mxu0 0.0
        %383 = vmatprep.subr.mxu0 0.0
        %384 = vmatpush2.msra.mxu0 0.0
        %385 = vmatprep.subr.mxu0 0.0
        %386 = vmatpush2.msra.mxu0 0.0
        %387 = vmatprep.subr.mxu0 0.0
        %388 = vmatpush2.msra.mxu0 0.0
        %389 = vmatprep.subr.mxu0 0.0
        %390 = vmatpush2.msra.mxu0 0.0
        %391 = vmatprep.subr.mxu0 0.0
        %392 = vmatpush2.msra.mxu0 0.0
        %393 = vmatprep.subr.mxu0 0.0
        %394 = vmatpush2.msra.mxu0 0.0
        %395 = vmatprep.subr.mxu0 0.0
        %396 = vmatpush2.msra.mxu0 0.0
        %397 = vmatprep.subr.mxu0 0.0
        %398 = vmatpush2.msra.mxu0 0.0
        %399 = vmatprep.mubr.f32.mxu0 0.0
        %400 = vmatmul.mubr.f32.gmra.mxu0 %v331
        %v401 = vpop.f32.mrf.mxu0
        %v402 = vadd.f32 0.0, %v401
        %v403 = vpop.f32.mrf.mxu0
        %404 = vdwg.mxu0
        %v405 = vadd.f32 %v323, %v402
        %s406 = scalar_lea.vmem %s0, 24
        %v407 = vld [vmem:[%s406] sm:$0xff]
        %408 = vrot.lane.b32.xlu0 %v168, 125
        %v409 = vpop.permute.xlu0 %408
        %v411 = vsel %vm174, %v407, 0
        %v413 = vsel %vm178, %v409, 0
        %415 = vmatprep.subr.mxu0 0.0
        %416 = vmatpush1.msra.mxu0 0.0
        %417 = vmatprep.subr.mxu0 0.0
        %418 = vmatpush1.msra.mxu0 0.0
        %419 = vmatprep.subr.mxu0 0.0
        %420 = vmatpush1.msra.mxu0 0.0
        %421 = vmatprep.subr.mxu0 0.0
        %422 = vmatpush1.msra.mxu0 0.0
        %423 = vmatprep.subr.mxu0 0.0
        %424 = vmatpush1.msra.mxu0 0.0
        %425 = vmatprep.subr.mxu0 0.0
        %426 = vmatpush1.msra.mxu0 0.0
        %427 = vmatprep.subr.mxu0 0.0
        %428 = vmatpush1.msra.mxu0 0.0
        %429 = vmatprep.subr.mxu0 0.0
        %430 = vmatpush1.msra.mxu0 0.0
        %431 = vmatprep.subr.mxu0 0.0
        %432 = vmatpush1.msra.mxu0 0.0
        %433 = vmatprep.subr.mxu0 0.0
        %434 = vmatpush1.msra.mxu0 0.0
        %435 = vmatprep.subr.mxu0 0.0
        %436 = vmatpush1.msra.mxu0 0.0
        %437 = vmatprep.subr.mxu0 0.0
        %438 = vmatpush1.msra.mxu0 0.0
        %439 = vmatprep.subr.mxu0 0.0
        %440 = vmatpush1.msra.mxu0 0.0
        %441 = vmatprep.subr.mxu0 0.0
        %442 = vmatpush1.msra.mxu0 0.0
        %443 = vmatprep.subr.mxu0 0.0
        %444 = vmatpush1.msra.mxu0 0.0
        %445 = vmatprep.subr.mxu0 0.0
        %446 = vmatpush1.msra.mxu0 %v413
        %447 = vmatprep.subr.mxu0 0.0
        %448 = vmatpush2.msra.mxu0 0.0
        %449 = vmatprep.subr.mxu0 0.0
        %450 = vmatpush2.msra.mxu0 0.0
        %451 = vmatprep.subr.mxu0 0.0
        %452 = vmatpush2.msra.mxu0 0.0
        %453 = vmatprep.subr.mxu0 0.0
        %454 = vmatpush2.msra.mxu0 0.0
        %455 = vmatprep.subr.mxu0 0.0
        %456 = vmatpush2.msra.mxu0 0.0
        %457 = vmatprep.subr.mxu0 0.0
        %458 = vmatpush2.msra.mxu0 0.0
        %459 = vmatprep.subr.mxu0 0.0
        %460 = vmatpush2.msra.mxu0 0.0
        %461 = vmatprep.subr.mxu0 0.0
        %462 = vmatpush2.msra.mxu0 0.0
        %463 = vmatprep.subr.mxu0 0.0
        %464 = vmatpush2.msra.mxu0 0.0
        %465 = vmatprep.subr.mxu0 0.0
        %466 = vmatpush2.msra.mxu0 0.0
        %467 = vmatprep.subr.mxu0 0.0
        %468 = vmatpush2.msra.mxu0 0.0
        %469 = vmatprep.subr.mxu0 0.0
        %470 = vmatpush2.msra.mxu0 0.0
        %471 = vmatprep.subr.mxu0 0.0
        %472 = vmatpush2.msra.mxu0 0.0
        %473 = vmatprep.subr.mxu0 0.0
        %474 = vmatpush2.msra.mxu0 0.0
        %475 = vmatprep.subr.mxu0 0.0
        %476 = vmatpush2.msra.mxu0 0.0
        %477 = vmatprep.subr.mxu0 0.0
        %478 = vmatpush2.msra.mxu0 0.0
        %479 = vmatprep.mubr.f32.mxu0 0.0
        %480 = vmatmul.mubr.f32.gmra.mxu0 %v411
        %v481 = vpop.f32.mrf.mxu0
        %v482 = vadd.f32 0.0, %v481
        %v483 = vpop.f32.mrf.mxu0
        %484 = vdwg.mxu0
        %v485 = vadd.f32 %v405, %v482
        %487 = vset.pattern.permute.xlu0 0
        %488 = vperm.xlu0 %487, %v166
        %v489 = vpop.permute.xlu0 %488
        %v491 = vadd.f32 %v485, %v489
        %vm492 = vcmask 269312
        %493 = vst.msk [vmem:[%s161] sm:$0xff] %vm492, %v491
        %s494 = sand.u32 %s93, 1
        %s495 = scalar_lea.sflag [#allocation3], %s494
        %s496 = sand.u32 %s93, 1
        %s497 = smul.addr %s496, 8
        %s498 = scalar_lea.vmem [#allocation2], %s497
        // Predicated region
        $region33: #{tpu_custom_call.1} parent=31 // pred_check
          %p499 = pneg %p103
        $region34: #{tpu_custom_call.1} parent=31 // pred_check_branch
          %501 = sbr.rel (%p499) target = $region36
        $region35: #{tpu_custom_call.1} parent=31 // pred_region
          %s503 = ssub.s32 128, 128
          %504 = vsyncadd %s495, %s503
          %s505 = smul.addr %s17, 128
          %s506 = scalar_lea.hbm %s3, %s505
          %s508 = sshll.u32 %s498, 4
          %s509 = int_to_ptr.vmem [resolvable:$true] %s508
          %511 = dma.vmem_to_hbm [thread:$0]  %s509, 128, %s506, %s495
        $region36: #{tpu_custom_call.1} parent=31 // pred_fallthru
          _
      $region32: #{tpu_custom_call.1} parent=5 // pred_fallthru
        _
      %p512 = scmp.le.s32.totalorder 2, %s12
      // Predicated region
      $region37: #{tpu_custom_call.1} parent=5 // pred_check
        %p513 = pneg %p512
      $region38: #{tpu_custom_call.1} parent=5 // pred_check_branch
        %515 = sbr.rel (%p513) target = $region40
      $region39: #{tpu_custom_call.1} parent=5 // pred_region
        %s516 = ssub.s32 %s12, 2
        // Predicated region
        $region41: #{tpu_custom_call.1} parent=39 // pred_check
          %p517 = pneg %p109
        $region42: #{tpu_custom_call.1} parent=39 // pred_check_branch
          %519 = sbr.rel (%p517) target = $region44
        $region43: #{tpu_custom_call.1} parent=39 // pred_region
          %s520 = sand.u32 %s94, 1
          %s521 = scalar_lea.sflag [#allocation3], %s520
          %s522 = sand.u32 %s94, 1
          %s523 = smul.addr %s522, 8
          %s524 = scalar_lea.vmem [#allocation2], %s523
          %525 = dma.done %s521, 128
        $region44: #{tpu_custom_call.1} parent=39 // pred_fallthru
          _
      $region40: #{tpu_custom_call.1} parent=5 // pred_fallthru
        _
    $region6: #{tpu_custom_call.1} parent=1 // loop_footer
      %s16 = sadd.s32 1, %s12
    $region7: #{tpu_custom_call.1} parent=1 // loop_footer_branch
      %11 = sbr.rel target = $region3
    $region8: #{tpu_custom_call.1} parent=1 // loop_exit
      _
    %526 = vsyncpa [#allocation3], 1
    %s527 = scalar_lea.sflag [#allocation3], 1
    %528 = vsyncpa %s527, 1

// kernel: tpu_custom_call.1
$region0: #{tpu_custom_call.1}
  #allocation0 [shape = 'u32[]', space=smem, size = 0x4, offset = 0x4, fixed_abs, tag = 'smem constant byte address 0x4 - core index']
  #allocation1 [shape = 'u32[144,128]{1,0:T(1,128)}', space=vmem, size = 0x12000, scoped, tag = 'internal scratch']
  %s0 = inlined_call_operand.vmem [shape: f32[4,8,4], index: 0, kind: input, shape index: {}]
  %s1 = inlined_call_operand.vmem [shape: f32[2,4,128], index: 1, kind: input, shape index: {}]
  %s2 = inlined_call_operand.vmem [shape: f32[8,1], index: 2, kind: input, shape index: {}]
  %s3 = inlined_call_operand.hbm [shape: f32[2,8,33], index: 3, kind: output, shape index: {}]
  %s4 = sld [smem:[#allocation0]]
  $region45: #{tpu_custom_call.1} parent=0
    _
  %s6 = ssub.s32 1, %s4
  %s7 = scalar_select 0, %s6, %s4
  $region1: #{tpu_custom_call.1} parent=0
    #allocation2 [shape = 'u8[8192]{0}', space=vmem, size = 0x2000, scoped, tag = 'output window, operand 0']
    #allocation3 [shape = 's32[2]{0}', space=sflag, size = 0x8, scoped, tag = 'scoped memory for tpu_custom_call.1']
    %8 = vsyncpa [#allocation3], 0
    %s9 = scalar_lea.sflag [#allocation3], 1
    %10 = vsyncpa %s9, 0
    loop: start=0, step=1, limit=4
    $region2: #{tpu_custom_call.1} parent=1 // loop_pre_header
      _
    $region3: #{tpu_custom_call.1} parent=1 // loop_header
      %s12 = sphi 0, %s16
      %p13 = scmp.ge.s32.totalorder %s12, 4
      %s20 = sphi 0, %s20
      %s22 = sphi 0, %s20
      %s23 = sphi 0, %s22
      %s37 = sphi 0, %s23
      %s43 = sphi 0, %s45
      %s46 = sphi 0, %s43
      %s47 = sphi 0, %s46
      %s63 = sphi 0, %s47
      %s67 = sphi 0, %s67
      %s69 = sphi 0, %s67
      %s70 = sphi 0, %s69
      %s84 = sphi 0, %s70
      %s90 = sphi 0, %s92
      %s93 = sphi 0, %s90
      %s94 = sphi 0, %s93
      %s110 = sphi 0, %s94
    $region4: #{tpu_custom_call.1} parent=1 // loop_header_branch
      %15 = sbr.rel (%p13) target = $region8
    $region5: #{tpu_custom_call.1} parent=1 // loop_body
      %s17 = ssub.s32 %s12, 1
      %s18 = ssub.s32 %s12, 2
      %s19 = sadd.s32 %s12, 1
      %s21 = sadd.s32 %s20, 1
      %p24 = scmp.eq.s32.totalorder %s12, 1
      %p25 = scmp.ne.s32.totalorder %s20, %s22
      %p26 = scmp.eq.s32.totalorder %s12, 0
      %p27 = por %p25, %p26
      %p28 = scmp.ne.s32.totalorder %s20, %s22
      %p29 = scmp.eq.s32.totalorder %s17, 1
      %p30 = por %p28, %p29
      %p31 = scmp.ne.s32.totalorder %s22, %s23
      %p32 = scmp.eq.s32.totalorder %s17, 0
      %p33 = por %p31, %p32
      %p34 = scmp.ne.s32.totalorder %s22, %s23
      %p35 = scmp.eq.s32.totalorder %s18, 1
      %p36 = por %p34, %p35
      %p38 = scmp.ne.s32.totalorder %s23, %s37
      %p39 = scmp.eq.s32.totalorder %s18, 0
      %p40 = por %p38, %p39
      %s41 = ssub.s32 %s12, %s19
      %p42 = scmp.eq.s32.totalorder %s41, 0
      %s44 = sadd.s32 %s43, 1
      %s45 = scalar_select %p42, %s43, %s44
      %p48 = pneg %p42
      %p49 = scmp.eq.s32.totalorder %s12, 1
      %p50 = por %p48, %p49
      %p51 = scmp.ne.s32.totalorder %s43, %s46
      %p52 = scmp.eq.s32.totalorder %s12, 0
      %p53 = por %p51, %p52
      %p54 = scmp.ne.s32.totalorder %s43, %s46
      %p55 = scmp.eq.s32.totalorder %s17, 1
      %p56 = por %p54, %p55
      %p57 = scmp.ne.s32.totalorder %s46, %s47
      %p58 = scmp.eq.s32.totalorder %s17, 0
      %p59 = por %p57, %p58
      %p60 = scmp.ne.s32.totalorder %s46, %s47
      %p61 = scmp.eq.s32.totalorder %s18, 1
      %p62 = por %p60, %p61
      %p64 = scmp.ne.s32.totalorder %s47, %s63
      %p65 = scmp.eq.s32.totalorder %s18, 0
      %p66 = por %p64, %p65
      %s68 = sadd.s32 %s67, 1
      %p71 = scmp.eq.s32.totalorder %s12, 1
      %p72 = scmp.ne.s32.totalorder %s67, %s69
      %p73 = scmp.eq.s32.totalorder %s12, 0
      %p74 = por %p72, %p73
      %p75 = scmp.ne.s32.totalorder %s67, %s69
      %p76 = scmp.eq.s32.totalorder %s17, 1
      %p77 = por %p75, %p76
      %p78 = scmp.ne.s32.totalorder %s69, %s70
      %p79 = scmp.eq.s32.totalorder %s17, 0
      %p80 = por %p78, %p79
      %p81 = scmp.ne.s32.totalorder %s69, %s70
      %p82 = scmp.eq.s32.totalorder %s18, 1
      %p83 = por %p81, %p82
      %p85 = scmp.ne.s32.totalorder %s70, %s84
      %p86 = scmp.eq.s32.totalorder %s18, 0
      %p87 = por %p85, %p86
      %s88 = ssub.s32 %s12, %s19
      %p89 = scmp.eq.s32.totalorder %s88, 0
      %s91 = sadd.s32 %s90, 1
      %s92 = scalar_select %p89, %s90, %s91
      %p95 = pneg %p89
      %p96 = scmp.eq.s32.totalorder %s12, 1
      %p97 = por %p95, %p96
      %p98 = scmp.ne.s32.totalorder %s90, %s93
      %p99 = scmp.eq.s32.totalorder %s12, 0
      %p100 = por %p98, %p99
      %p101 = scmp.ne.s32.totalorder %s90, %s93
      %p102 = scmp.eq.s32.totalorder %s17, 1
      %p103 = por %p101, %p102
      %p104 = scmp.ne.s32.totalorder %s93, %s94
      %p105 = scmp.eq.s32.totalorder %s17, 0
      %p106 = por %p104, %p105
      %p107 = scmp.ne.s32.totalorder %s93, %s94
      %p108 = scmp.eq.s32.totalorder %s18, 1
      %p109 = por %p107, %p108
      %p111 = scmp.ne.s32.totalorder %s94, %s110
      %p112 = scmp.eq.s32.totalorder %s18, 0
      %p113 = por %p111, %p112
      %p114 = scmp.le.s32.totalorder 1, %s12
      %p115 = scmp.lt.s32.totalorder %s12, 3
      %p116 = pnand %p114, %p115
      %p117 = pneg %p116
      // Predicated region
      $region9: #{tpu_custom_call.1} parent=5 // pred_check
        _
      $region10: #{tpu_custom_call.1} parent=5 // pred_check_branch
        %119 = sbr.rel (%p116) target = $region12
      $region11: #{tpu_custom_call.1} parent=5 // pred_region
        %s120 = ssub.s32 %s12, 1
        // Predicated region
        $region13: #{tpu_custom_call.1} parent=11 // pred_check
          %p121 = pneg %p33
        $region14: #{tpu_custom_call.1} parent=11 // pred_check_branch
          %123 = sbr.rel (%p121) target = $region16
        $region15: #{tpu_custom_call.1} parent=11 // pred_region
          _
        $region16: #{tpu_custom_call.1} parent=11 // pred_fallthru
          _
        // Predicated region
        $region17: #{tpu_custom_call.1} parent=11 // pred_check
          %p124 = pneg %p80
        $region18: #{tpu_custom_call.1} parent=11 // pred_check_branch
          %126 = sbr.rel (%p124) target = $region20
        $region19: #{tpu_custom_call.1} parent=11 // pred_region
          _
        $region20: #{tpu_custom_call.1} parent=11 // pred_fallthru
          _
      $region12: #{tpu_custom_call.1} parent=5 // pred_fallthru
        _
      %p127 = scmp.lt.s32.totalorder %s12, 2
      // Predicated region
      $region21: #{tpu_custom_call.1} parent=5 // pred_check
        %p128 = pneg %p127
      $region22: #{tpu_custom_call.1} parent=5 // pred_check_branch
        %130 = sbr.rel (%p128) target = $region24
      $region23: #{tpu_custom_call.1} parent=5 // pred_region
        // Predicated region
        $region25: #{tpu_custom_call.1} parent=23 // pred_check
          %p131 = pneg %p53
        $region26: #{tpu_custom_call.1} parent=23 // pred_check_branch
          %133 = sbr.rel (%p131) target = $region28
        $region27: #{tpu_custom_call.1} parent=23 // pred_region
          %p134 = scmp.lt.s32.totalorder %s12, 1
          %s135 = scalar_select %p134, %s12, 1
          %s136 = smul.addr %s135, 4
          %s137 = scalar_lea.vmem %s1, %s136
        $region28: #{tpu_custom_call.1} parent=23 // pred_fallthru
          _
      $region24: #{tpu_custom_call.1} parent=5 // pred_fallthru
        _
      %p138 = scmp.le.s32.totalorder 1, %s12
      %p139 = scmp.lt.s32.totalorder %s12, 3
      %p140 = pnand %p138, %p139
      %p141 = pneg %p140
      // Predicated region
      $region29: #{tpu_custom_call.1} parent=5 // pred_check
        _
      $region30: #{tpu_custom_call.1} parent=5 // pred_check_branch
        %143 = sbr.rel (%p140) target = $region32
      $region31: #{tpu_custom_call.1} parent=5 // pred_region
        %s144 = ssub.s32 %s12, 1
        %p145 = pneg %p33
        %p146 = pneg %p30
        %p147 = scmp.lt.s32.totalorder %s17, 1
        %s148 = scalar_select %p147, %s17, 1
        %s149 = smul.addr %s148, 4
        %s150 = scalar_lea.vmem %s1, %s149
        %p151 = pneg %p59
        %p152 = pneg %p56
        %p153 = pneg %p80
        %p154 = pneg %p77
        %p155 = pneg %p106
        %p156 = pneg %p103
        %s157 = sand.u32 %s93, 1
        %s158 = scalar_lea.sflag [#allocation3], %s157
        %s159 = sand.u32 %s93, 1
        %s160 = smul.addr %s159, 8
        %s161 = scalar_lea.vmem [#allocation2], %s160
        %p162 = scmp.lt.s32.totalorder %s17, 1
        %s163 = scalar_select %p162, %s17, 1
        %s164 = smul.addr %s163, 4
        %s165 = scalar_lea.vmem %s1, %s164
        %v166 = vld [vmem:[%s2] sm:$0xff]
        %v167 = vld [vmem:[%s0] sm:$0xff]
        %v168 = vld [vmem:[%s165] sm:$0xf]
        %s169 = scalar_lea.vmem %s0, 8
        %v170 = vld [vmem:[%s169] sm:$0xff]
        %172 = vrot.lane.b32.xlu0 %v168, 127
        %v173 = vpop.permute.xlu0 %172
        %vm174 = vcmask 31744
        %v176 = vsel %vm174, %v170, 0
        %vm178 = vcmask 1043456
        %v179 = vsel %vm178, %v173, 0
        %181 = vmatprep.subr.mxu0 0.0
        %182 = vmatpush1.msra.mxu0 0.0
        %183 = vmatprep.subr.mxu0 0.0
        %184 = vmatpush1.msra.mxu0 0.0
        %185 = vmatprep.subr.mxu0 0.0
        %186 = vmatpush1.msra.mxu0 0.0
        %187 = vmatprep.subr.mxu0 0.0
        %188 = vmatpush1.msra.mxu0 0.0
        %189 = vmatprep.subr.mxu0 0.0
        %190 = vmatpush1.msra.mxu0 0.0
        %191 = vmatprep.subr.mxu0 0.0
        %192 = vmatpush1.msra.mxu0 0.0
        %193 = vmatprep.subr.mxu0 0.0
        %194 = vmatpush1.msra.mxu0 0.0
        %195 = vmatprep.subr.mxu0 0.0
        %196 = vmatpush1.msra.mxu0 0.0
        %197 = vmatprep.subr.mxu0 0.0
        %198 = vmatpush1.msra.mxu0 0.0
        %199 = vmatprep.subr.mxu0 0.0
        %200 = vmatpush1.msra.mxu0 0.0
        %201 = vmatprep.subr.mxu0 0.0
        %202 = vmatpush1.msra.mxu0 0.0
        %203 = vmatprep.subr.mxu0 0.0
        %204 = vmatpush1.msra.mxu0 0.0
        %205 = vmatprep.subr.mxu0 0.0
        %206 = vmatpush1.msra.mxu0 0.0
        %207 = vmatprep.subr.mxu0 0.0
        %208 = vmatpush1.msra.mxu0 0.0
        %209 = vmatprep.subr.mxu0 0.0
        %210 = vmatpush1.msra.mxu0 0.0
        %211 = vmatprep.subr.mxu0 0.0
        %212 = vmatpush1.msra.mxu0 %v179
        %213 = vmatprep.subr.mxu0 0.0
        %214 = vmatpush2.msra.mxu0 0.0
        %215 = vmatprep.subr.mxu0 0.0
        %216 = vmatpush2.msra.mxu0 0.0
        %217 = vmatprep.subr.mxu0 0.0
        %218 = vmatpush2.msra.mxu0 0.0
        %219 = vmatprep.subr.mxu0 0.0
        %220 = vmatpush2.msra.mxu0 0.0
        %221 = vmatprep.subr.mxu0 0.0
        %222 = vmatpush2.msra.mxu0 0.0
        %223 = vmatprep.subr.mxu0 0.0
        %224 = vmatpush2.msra.mxu0 0.0
        %225 = vmatprep.subr.mxu0 0.0
        %226 = vmatpush2.msra.mxu0 0.0
        %227 = vmatprep.subr.mxu0 0.0
        %228 = vmatpush2.msra.mxu0 0.0
        %229 = vmatprep.subr.mxu0 0.0
        %230 = vmatpush2.msra.mxu0 0.0
        %231 = vmatprep.subr.mxu0 0.0
        %232 = vmatpush2.msra.mxu0 0.0
        %233 = vmatprep.subr.mxu0 0.0
        %234 = vmatpush2.msra.mxu0 0.0
        %235 = vmatprep.subr.mxu0 0.0
        %236 = vmatpush2.msra.mxu0 0.0
        %237 = vmatprep.subr.mxu0 0.0
        %238 = vmatpush2.msra.mxu0 0.0
        %239 = vmatprep.subr.mxu0 0.0
        %240 = vmatpush2.msra.mxu0 0.0
        %241 = vmatprep.subr.mxu0 0.0
        %242 = vmatpush2.msra.mxu0 0.0
        %243 = vmatprep.subr.mxu0 0.0
        %244 = vmatpush2.msra.mxu0 0.0
        %245 = vmatprep.mubr.f32.mxu0 0.0
        %246 = vmatmul.mubr.f32.gmra.mxu0 %v176
        %v247 = vpop.f32.mrf.mxu0
        %v248 = vadd.f32 0.0, %v247
        %v249 = vpop.f32.mrf.mxu0
        %250 = vdwg.mxu0
        %v252 = vsel %vm174, %v167, 0
        %v254 = vsel %vm178, %v168, 0
        %256 = vmatprep.subr.mxu0 0.0
        %257 = vmatpush1.msra.mxu0 0.0
        %258 = vmatprep.subr.mxu0 0.0
        %259 = vmatpush1.msra.mxu0 0.0
        %260 = vmatprep.subr.mxu0 0.0
        %261 = vmatpush1.msra.mxu0 0.0
        %262 = vmatprep.subr.mxu0 0.0
        %263 = vmatpush1.msra.mxu0 0.0
        %264 = vmatprep.subr.mxu0 0.0
        %265 = vmatpush1.msra.mxu0 0.0
        %266 = vmatprep.subr.mxu0 0.0
        %267 = vmatpush1.msra.mxu0 0.0
        %268 = vmatprep.subr.mxu0 0.0
        %269 = vmatpush1.msra.mxu0 0.0
        %270 = vmatprep.subr.mxu0 0.0
        %271 = vmatpush1.msra.mxu0 0.0
        %272 = vmatprep.subr.mxu0 0.0
        %273 = vmatpush1.msra.mxu0 0.0
        %274 = vmatprep.subr.mxu0 0.0
        %275 = vmatpush1.msra.mxu0 0.0
        %276 = vmatprep.subr.mxu0 0.0
        %277 = vmatpush1.msra.mxu0 0.0
        %278 = vmatprep.subr.mxu0 0.0
        %279 = vmatpush1.msra.mxu0 0.0
        %280 = vmatprep.subr.mxu0 0.0
        %281 = vmatpush1.msra.mxu0 0.0
        %282 = vmatprep.subr.mxu0 0.0
        %283 = vmatpush1.msra.mxu0 0.0
        %284 = vmatprep.subr.mxu0 0.0
        %285 = vmatpush1.msra.mxu0 0.0
        %286 = vmatprep.subr.mxu0 0.0
        %287 = vmatpush1.msra.mxu0 %v254
        %288 = vmatprep.subr.mxu0 0.0
        %289 = vmatpush2.msra.mxu0 0.0
        %290 = vmatprep.subr.mxu0 0.0
        %291 = vmatpush2.msra.mxu0 0.0
        %292 = vmatprep.subr.mxu0 0.0
        %293 = vmatpush2.msra.mxu0 0.0
        %294 = vmatprep.subr.mxu0 0.0
        %295 = vmatpush2.msra.mxu0 0.0
        %296 = vmatprep.subr.mxu0 0.0
        %297 = vmatpush2.msra.mxu0 0.0
        %298 = vmatprep.subr.mxu0 0.0
        %299 = vmatpush2.msra.mxu0 0.0
        %300 = vmatprep.subr.mxu0 0.0
        %301 = vmatpush2.msra.mxu0 0.0
        %302 = vmatprep.subr.mxu0 0.0
        %303 = vmatpush2.msra.mxu0 0.0
        %304 = vmatprep.subr.mxu0 0.0
        %305 = vmatpush2.msra.mxu0 0.0
        %306 = vmatprep.subr.mxu0 0.0
        %307 = vmatpush2.msra.mxu0 0.0
        %308 = vmatprep.subr.mxu0 0.0
        %309 = vmatpush2.msra.mxu0 0.0
        %310 = vmatprep.subr.mxu0 0.0
        %311 = vmatpush2.msra.mxu0 0.0
        %312 = vmatprep.subr.mxu0 0.0
        %313 = vmatpush2.msra.mxu0 0.0
        %314 = vmatprep.subr.mxu0 0.0
        %315 = vmatpush2.msra.mxu0 0.0
        %316 = vmatprep.subr.mxu0 0.0
        %317 = vmatpush2.msra.mxu0 0.0
        %318 = vmatprep.subr.mxu0 0.0
        %319 = vmatpush2.msra.mxu0 0.0
        %320 = vmatprep.mubr.f32.mxu0 0.0
        %321 = vmatmul.mubr.f32.gmra.mxu0 %v252
        %v322 = vpop.f32.mrf.mxu0
        %v323 = vadd.f32 %v248, %v322
        %v324 = vpop.f32.mrf.mxu0
        %325 = vdwg.mxu0
        %s326 = scalar_lea.vmem %s0, 16
        %v327 = vld [vmem:[%s326] sm:$0xff]
        %328 = vrot.lane.b32.xlu0 %v168, 126
        %v329 = vpop.permute.xlu0 %328
        %v331 = vsel %vm174, %v327, 0
        %v333 = vsel %vm178, %v329, 0
        %335 = vmatprep.subr.mxu0 0.0
        %336 = vmatpush1.msra.mxu0 0.0
        %337 = vmatprep.subr.mxu0 0.0
        %338 = vmatpush1.msra.mxu0 0.0
        %339 = vmatprep.subr.mxu0 0.0
        %340 = vmatpush1.msra.mxu0 0.0
        %341 = vmatprep.subr.mxu0 0.0
        %342 = vmatpush1.msra.mxu0 0.0
        %343 = vmatprep.subr.mxu0 0.0
        %344 = vmatpush1.msra.mxu0 0.0
        %345 = vmatprep.subr.mxu0 0.0
        %346 = vmatpush1.msra.mxu0 0.0
        %347 = vmatprep.subr.mxu0 0.0
        %348 = vmatpush1.msra.mxu0 0.0
        %349 = vmatprep.subr.mxu0 0.0
        %350 = vmatpush1.msra.mxu0 0.0
        %351 = vmatprep.subr.mxu0 0.0
        %352 = vmatpush1.msra.mxu0 0.0
        %353 = vmatprep.subr.mxu0 0.0
        %354 = vmatpush1.msra.mxu0 0.0
        %355 = vmatprep.subr.mxu0 0.0
        %356 = vmatpush1.msra.mxu0 0.0
        %357 = vmatprep.subr.mxu0 0.0
        %358 = vmatpush1.msra.mxu0 0.0
        %359 = vmatprep.subr.mxu0 0.0
        %360 = vmatpush1.msra.mxu0 0.0
        %361 = vmatprep.subr.mxu0 0.0
        %362 = vmatpush1.msra.mxu0 0.0
        %363 = vmatprep.subr.mxu0 0.0
        %364 = vmatpush1.msra.mxu0 0.0
        %365 = vmatprep.subr.mxu0 0.0
        %366 = vmatpush1.msra.mxu0 %v333
        %367 = vmatprep.subr.mxu0 0.0
        %368 = vmatpush2.msra.mxu0 0.0
        %369 = vmatprep.subr.mxu0 0.0
        %370 = vmatpush2.msra.mxu0 0.0
        %371 = vmatprep.subr.mxu0 0.0
        %372 = vmatpush2.msra.mxu0 0.0
        %373 = vmatprep.subr.mxu0 0.0
        %374 = vmatpush2.msra.mxu0 0.0
        %375 = vmatprep.subr.mxu0 0.0
        %376 = vmatpush2.msra.mxu0 0.0
        %377 = vmatprep.subr.mxu0 0.0
        %378 = vmatpush2.msra.mxu0 0.0
        %379 = vmatprep.subr.mxu0 0.0
        %380 = vmatpush2.msra.mxu0 0.0
        %381 = vmatprep.subr.mxu0 0.0
        %382 = vmatpush2.msra.mxu0 0.0
        %383 = vmatprep.subr.mxu0 0.0
        %384 = vmatpush2.msra.mxu0 0.0
        %385 = vmatprep.subr.mxu0 0.0
        %386 = vmatpush2.msra.mxu0 0.0
        %387 = vmatprep.subr.mxu0 0.0
        %388 = vmatpush2.msra.mxu0 0.0
        %389 = vmatprep.subr.mxu0 0.0
        %390 = vmatpush2.msra.mxu0 0.0
        %391 = vmatprep.subr.mxu0 0.0
        %392 = vmatpush2.msra.mxu0 0.0
        %393 = vmatprep.subr.mxu0 0.0
        %394 = vmatpush2.msra.mxu0 0.0
        %395 = vmatprep.subr.mxu0 0.0
        %396 = vmatpush2.msra.mxu0 0.0
        %397 = vmatprep.subr.mxu0 0.0
        %398 = vmatpush2.msra.mxu0 0.0
        %399 = vmatprep.mubr.f32.mxu0 0.0
        %400 = vmatmul.mubr.f32.gmra.mxu0 %v331
        %v401 = vpop.f32.mrf.mxu0
        %v402 = vadd.f32 0.0, %v401
        %v403 = vpop.f32.mrf.mxu0
        %404 = vdwg.mxu0
        %v405 = vadd.f32 %v323, %v402
        %s406 = scalar_lea.vmem %s0, 24
        %v407 = vld [vmem:[%s406] sm:$0xff]
        %408 = vrot.lane.b32.xlu0 %v168, 125
        %v409 = vpop.permute.xlu0 %408
        %v411 = vsel %vm174, %v407, 0
        %v413 = vsel %vm178, %v409, 0
        %415 = vmatprep.subr.mxu0 0.0
        %416 = vmatpush1.msra.mxu0 0.0
        %417 = vmatprep.subr.mxu0 0.0
        %418 = vmatpush1.msra.mxu0 0.0
        %419 = vmatprep.subr.mxu0 0.0
        %420 = vmatpush1.msra.mxu0 0.0
        %421 = vmatprep.subr.mxu0 0.0
        %422 = vmatpush1.msra.mxu0 0.0
        %423 = vmatprep.subr.mxu0 0.0
        %424 = vmatpush1.msra.mxu0 0.0
        %425 = vmatprep.subr.mxu0 0.0
        %426 = vmatpush1.msra.mxu0 0.0
        %427 = vmatprep.subr.mxu0 0.0
        %428 = vmatpush1.msra.mxu0 0.0
        %429 = vmatprep.subr.mxu0 0.0
        %430 = vmatpush1.msra.mxu0 0.0
        %431 = vmatprep.subr.mxu0 0.0
        %432 = vmatpush1.msra.mxu0 0.0
        %433 = vmatprep.subr.mxu0 0.0
        %434 = vmatpush1.msra.mxu0 0.0
        %435 = vmatprep.subr.mxu0 0.0
        %436 = vmatpush1.msra.mxu0 0.0
        %437 = vmatprep.subr.mxu0 0.0
        %438 = vmatpush1.msra.mxu0 0.0
        %439 = vmatprep.subr.mxu0 0.0
        %440 = vmatpush1.msra.mxu0 0.0
        %441 = vmatprep.subr.mxu0 0.0
        %442 = vmatpush1.msra.mxu0 0.0
        %443 = vmatprep.subr.mxu0 0.0
        %444 = vmatpush1.msra.mxu0 0.0
        %445 = vmatprep.subr.mxu0 0.0
        %446 = vmatpush1.msra.mxu0 %v413
        %447 = vmatprep.subr.mxu0 0.0
        %448 = vmatpush2.msra.mxu0 0.0
        %449 = vmatprep.subr.mxu0 0.0
        %450 = vmatpush2.msra.mxu0 0.0
        %451 = vmatprep.subr.mxu0 0.0
        %452 = vmatpush2.msra.mxu0 0.0
        %453 = vmatprep.subr.mxu0 0.0
        %454 = vmatpush2.msra.mxu0 0.0
        %455 = vmatprep.subr.mxu0 0.0
        %456 = vmatpush2.msra.mxu0 0.0
        %457 = vmatprep.subr.mxu0 0.0
        %458 = vmatpush2.msra.mxu0 0.0
        %459 = vmatprep.subr.mxu0 0.0
        %460 = vmatpush2.msra.mxu0 0.0
        %461 = vmatprep.subr.mxu0 0.0
        %462 = vmatpush2.msra.mxu0 0.0
        %463 = vmatprep.subr.mxu0 0.0
        %464 = vmatpush2.msra.mxu0 0.0
        %465 = vmatprep.subr.mxu0 0.0
        %466 = vmatpush2.msra.mxu0 0.0
        %467 = vmatprep.subr.mxu0 0.0
        %468 = vmatpush2.msra.mxu0 0.0
        %469 = vmatprep.subr.mxu0 0.0
        %470 = vmatpush2.msra.mxu0 0.0
        %471 = vmatprep.subr.mxu0 0.0
        %472 = vmatpush2.msra.mxu0 0.0
        %473 = vmatprep.subr.mxu0 0.0
        %474 = vmatpush2.msra.mxu0 0.0
        %475 = vmatprep.subr.mxu0 0.0
        %476 = vmatpush2.msra.mxu0 0.0
        %477 = vmatprep.subr.mxu0 0.0
        %478 = vmatpush2.msra.mxu0 0.0
        %479 = vmatprep.mubr.f32.mxu0 0.0
        %480 = vmatmul.mubr.f32.gmra.mxu0 %v411
        %v481 = vpop.f32.mrf.mxu0
        %v482 = vadd.f32 0.0, %v481
        %v483 = vpop.f32.mrf.mxu0
        %484 = vdwg.mxu0
        %v485 = vadd.f32 %v405, %v482
        %487 = vset.pattern.permute.xlu0 0
        %488 = vperm.xlu0 %487, %v166
        %v489 = vpop.permute.xlu0 %488
        %v491 = vadd.f32 %v485, %v489
        %vm492 = vcmask 269312
        %493 = vst.msk [vmem:[%s161] sm:$0xff] %vm492, %v491
        %s494 = sand.u32 %s93, 1
        %s495 = scalar_lea.sflag [#allocation3], %s494
        %s496 = sand.u32 %s93, 1
        %s497 = smul.addr %s496, 8
        %s498 = scalar_lea.vmem [#allocation2], %s497
        // Predicated region
        $region33: #{tpu_custom_call.1} parent=31 // pred_check
          %p499 = pneg %p103
        $region34: #{tpu_custom_call.1} parent=31 // pred_check_branch
          %501 = sbr.rel (%p499) target = $region36
        $region35: #{tpu_custom_call.1} parent=31 // pred_region
          %s503 = ssub.s32 128, 128
          %504 = vsyncadd %s495, %s503
          %s505 = smul.addr %s17, 128
          %s506 = scalar_lea.hbm %s3, %s505
          %s508 = sshll.u32 %s498, 4
          %s509 = int_to_ptr.vmem [resolvable:$true] %s508
          %511 = dma.vmem_to_hbm [thread:$0]  %s509, 128, %s506, %s495
        $region36: #{tpu_custom_call.1} parent=31 // pred_fallthru
          _
      $region32: #{tpu_custom_call.1} parent=5 // pred_fallthru
        _
      %p512 = scmp.le.s32.totalorder 2, %s12
      // Predicated region
      $region37: #{tpu_custom_call.1} parent=5 // pred_check
        %p513 = pneg %p512
      $region38: #{tpu_custom_call.1} parent=5 // pred_check_branch
        %515 = sbr.rel (%p513) target = $region40
      $region39: #{tpu_custom_call.1} parent=5 // pred_region
        %s516 = ssub.s32 %s12, 2
        // Predicated region
        $region41: #{tpu_custom_call.1} parent=39 // pred_check
          %p517 = pneg %p109
        $region42: #{tpu_custom_call.1} parent=39 // pred_check_branch
          %519 = sbr.rel (%p517) target = $region44
        $region43: #{tpu_custom_call.1} parent=39 // pred_region
          %s520 = sand.u32 %s94, 1
          %s521 = scalar_lea.sflag [#allocation3], %s520
          %s522 = sand.u32 %s94, 1
          %s523 = smul.addr %s522, 8
          %s524 = scalar_lea.vmem [#allocation2], %s523
          %525 = dma.done %s521, 128
        $region44: #{tpu_custom_call.1} parent=39 // pred_fallthru
          _
      $region40: #{tpu_custom_call.1} parent=5 // pred_fallthru
        _
    $region6: #{tpu_custom_call.1} parent=1 // loop_footer
      %s16 = sadd.s32 1, %s12
    $region7: #{tpu_custom_call.1} parent=1 // loop_footer_branch
      %11 = sbr.rel target = $region3
    $region8: #{tpu_custom_call.1} parent=1 // loop_exit
      _
    %526 = vsyncpa [#allocation3], 1
    %s527 = scalar_lea.sflag [#allocation3], 1
    %528 = vsyncpa %s527, 1

</llo_original>
